<compile_context>
chip_gen: v7x
topology: tpu7x:2x2x1
jax: 0.10.0
libtpu: 0.0.40
codegen_flags: <defaults>
</compile_context>

<pallas_src>
import jax
import jax.numpy as jnp
from jax.experimental import pallas as pl
from jax.experimental.pallas import tpu as pltpu


def _round_up(x, m):
    return (x + m - 1) // m * m


def _mlp_kernel(x_ref, w1_ref, b1_ref, w2_ref, b2_ref, w3_ref, b3_ref, out_ref):
    # Matmuls in bf16 on the MXU with f32 accumulation; elementwise stays f32.
    x_bf = x_ref[...].astype(jnp.bfloat16)

    # ---- l1: Linear + ReLU ----
    h1 = jnp.dot(x_bf, w1_ref[...], preferred_element_type=jnp.float32)
    h1 = jnp.maximum(h1 + b1_ref[...], 0.0)          # b1 is (1, H1) -> broadcast

    # ---- l2: Linear + ReLU ----
    h2 = jnp.dot(h1.astype(jnp.bfloat16), w2_ref[...],
                 preferred_element_type=jnp.float32)
    h2 = jnp.maximum(h2 + b2_ref[...], 0.0)

    # ---- l3: Linear ----
    logits = jnp.dot(h2.astype(jnp.bfloat16), w3_ref[...],
                     preferred_element_type=jnp.float32)
    logits = logits + b3_ref[...]

    # ---- Softmax over dim=1 (classes): f32, max-subtracted, EXACT divide so
    # row sums stay 1 (approx reciprocal was off by >1e-3).
    m = jnp.max(logits, axis=1, keepdims=True)
    e = jnp.exp(logits - m)
    denom = jnp.sum(e, axis=1, keepdims=True)
    out_ref[...] = (e / denom).astype(out_ref.dtype)


def linear_network_forward(x, w1, b1, w2, b2, w3, b3, *, tile_b=512):
    """Forward pass of LinearNetwork as one Pallas TPU kernel.

    x  : [B, input_size]   float32
    w1 : [input_size, H1] (bf16), b1: [1, H1] (f32)
    w2 : [H1, H2]         (bf16), b2: [1, H2] (f32)
    w3 : [H2, C]          (bf16), b3: [1, C]  (f32)
    returns softmax probabilities [B, C] float32
    """
    B, in_dim = x.shape
    H1 = w1.shape[1]
    H2 = w2.shape[1]
    C = w3.shape[1]

    # Weights should already be bf16 (cast ONCE at init / checkpoint load);
    # this is a no-op in that case.  Biases stay f32.
    def as_bf16(w):
        return w if w.dtype == jnp.bfloat16 else w.astype(jnp.bfloat16)
    w1, w2, w3 = as_bf16(w1), as_bf16(w2), as_bf16(w3)

    # ---- batch tile: multiple of 8 sublanes; at least 2 tiles when B allows
    # it so both v7x TensorCores get work under "parallel" semantics.  No
    # padding of x: the last (possibly ragged) tile is handled by Pallas.
    tile_b = max(8, _round_up(min(tile_b, B), 8))
    if B > 8:
        tile_b = min(tile_b, max(8, _round_up(-(-B // 2), 8)))
    num_tiles = pl.cdiv(B, tile_b)

    # ---- explicit VMEM budget (bytes): resident weights/biases (conservatively
    # counted double-buffered), double-buffered x/out tiles, f32 intermediates.
    def nbytes(a):
        return a.size * a.dtype.itemsize
    resident_bytes = sum(nbytes(a) for a in (w1, b1, w2, b2, w3, b3))
    stream_bytes = 2 * tile_b * in_dim * 4 + 2 * tile_b * C * 4
    interm_bytes = 2 * tile_b * (H1 + H2 + C) * 4
    vmem_need = 2 * resident_bytes + stream_bytes + interm_bytes + (1 << 20)
    # TODO(synk): add an output-feature-tiled fallback (per-layer pallas_calls
    # with a K-reduction grid) for models whose resident weights exceed VMEM,
    # and single-buffer the resident specs (pipeline_mode=pl.Buffered(1)) on
    # v7x to halve their footprint, instead of asserting here.
    assert vmem_need <= (64 << 20), (
        f"resident weights ({resident_bytes} B) too large for the fused "
        "single-pass all-weights-resident kernel")
    vmem_limit = int(min(max(vmem_need, 32 << 20), 64 << 20))

    # Weights / biases: full blocks with a constant index_map -> they stay
    # VMEM-resident across all grid steps (DMA'd once).
    def resident(a):
        return pl.BlockSpec(a.shape, lambda i: (0,) * a.ndim)

    cost = pl.CostEstimate(
        flops=2 * B * (in_dim * H1 + H1 * H2 + H2 * C),
        transcendentals=B * C,
        bytes_accessed=int(x.size * x.dtype.itemsize + resident_bytes + B * C * 4),
    )

    out = pl.pallas_call(
        _mlp_kernel,
        out_shape=jax.ShapeDtypeStruct((B, C), jnp.float32),
        grid=(num_tiles,),
        in_specs=[
            pl.BlockSpec((tile_b, in_dim), lambda i: (i, 0)),  # x: batch-tiled
            resident(w1), resident(b1),
            resident(w2), resident(b2),
            resident(w3), resident(b3),
        ],
        out_specs=pl.BlockSpec((tile_b, C), lambda i: (i, 0)),
        compiler_params=pltpu.CompilerParams(
            # Batch tiles are independent -> megacore-shardable on v7x.
            dimension_semantics=("parallel",),
            vmem_limit_bytes=vmem_limit,
        ),
        cost_estimate=cost,
    )(x, w1, b1, w2, b2, w3, b3)
    return out


def init_params(key, input_size, hidden_size1, hidden_size2, num_classes):
    """nn.Linear-style U(-1/sqrt(fan_in)) init.

    Weights are cast to bf16 ONCE here (persistent storage dtype) so the
    forward pass never pays a per-call HBM cast; biases stay f32.
    """
    def linear(key, fan_in, fan_out):
        kw, kb = jax.random.split(key)
        bound = 1.0 / jnp.sqrt(fan_in)
        w = jax.random.uniform(kw, (fan_in, fan_out), jnp.float32, -bound, bound)
        b = jax.random.uniform(kb, (1, fan_out), jnp.float32, -bound, bound)
        return w.astype(jnp.bfloat16), b

    k1, k2, k3 = jax.random.split(key, 3)
    w1, b1 = linear(k1, input_size, hidden_size1)
    w2, b2 = linear(k2, hidden_size1, hidden_size2)
    w3, b3 = linear(k3, hidden_size2, num_classes)
    return w1, b1, w2, b2, w3, b3


if __name__ == "__main__":
    # Small shapes consistent with an MLP classifier head.  tile_b=8 with
    # batch=20 exercises multiple grid steps plus a ragged (partial) last tile.
    batch = 20
    input_size = 32
    hidden_size1 = 64
    hidden_size2 = 32
    num_classes = 10

    key = jax.random.PRNGKey(0)
    kx, kp = jax.random.split(key)
    x = jax.random.normal(kx, (batch, input_size), dtype=jnp.float32)
    params = init_params(kp, input_size, hidden_size1, hidden_size2, num_classes)

    out = linear_network_forward(x, *params, tile_b=8)
    out = jax.block_until_ready(out)
    assert out.shape == (batch, num_classes)

    w1, b1, w2, b2, w3, b3 = params

    # Precision-matched reference (bf16 matmul operands, f32 accumulate).
    def mm(a, w):
        return jnp.dot(a.astype(jnp.bfloat16), w, preferred_element_type=jnp.float32)
    h = jnp.maximum(mm(x, w1) + b1, 0.0)
    h = jnp.maximum(mm(h, w2) + b2, 0.0)
    ref_matched = jax.nn.softmax(mm(h, w3) + b3, axis=1)

    # Full-f32 reference (PyTorch-equivalent math on the bf16-rounded weights).
    h32 = jnp.maximum(x @ w1.astype(jnp.float32) + b1, 0.0)
    h32 = jnp.maximum(h32 @ w2.astype(jnp.float32) + b2, 0.0)
    ref_f32 = jax.nn.softmax(h32 @ w3.astype(jnp.float32) + b3, axis=1)

    assert jnp.allclose(out, ref_matched, atol=2e-3), "mismatch vs matched-precision reference"
    assert jnp.allclose(out, ref_f32, atol=3e-2), "mismatch vs f32 reference"
    assert jnp.allclose(jnp.sum(out, axis=1), 1.0, atol=1e-5), "rows must sum to 1"

    print("KERNEL_OK")
</pallas_src>

<mosaic_0001>
module attributes {stable_mosaic.version = 11 : i64} {
  func.func @_mlp_kernel(%arg0: i32, %arg1: memref<8x32xf32, #tpu.memory_space<vmem>>, %arg2: memref<32x64xbf16, #tpu.memory_space<vmem>>, %arg3: memref<1x64xf32, #tpu.memory_space<vmem>>, %arg4: memref<64x32xbf16, #tpu.memory_space<vmem>>, %arg5: memref<1x32xf32, #tpu.memory_space<vmem>>, %arg6: memref<32x10xbf16, #tpu.memory_space<vmem>>, %arg7: memref<1x10xf32, #tpu.memory_space<vmem>>, %arg8: memref<8x10xf32, #tpu.memory_space<vmem>>) attributes {dimension_semantics = [#tpu.dimension_semantics<parallel>], iteration_bounds = array<i64: 3>, scalar_prefetch = 0 : i64, scratch_operands = 0 : i64, tpu.core_type = #tpu.core_type<tc>, window_params = [{transform_indices = @transform_0, window_bounds = array<i64: 8, 32>}, {pipeline_mode = #tpu.pipeline_mode<synchronous>, transform_indices = @transform_1, window_bounds = array<i64: 32, 64>}, {pipeline_mode = #tpu.pipeline_mode<synchronous>, transform_indices = @transform_2, window_bounds = array<i64: 1, 64>}, {pipeline_mode = #tpu.pipeline_mode<synchronous>, transform_indices = @transform_3, window_bounds = array<i64: 64, 32>}, {pipeline_mode = #tpu.pipeline_mode<synchronous>, transform_indices = @transform_4, window_bounds = array<i64: 1, 32>}, {pipeline_mode = #tpu.pipeline_mode<synchronous>, transform_indices = @transform_5, window_bounds = array<i64: 32, 10>}, {pipeline_mode = #tpu.pipeline_mode<synchronous>, transform_indices = @transform_6, window_bounds = array<i64: 1, 10>}, {transform_indices = @transform_7, window_bounds = array<i64: 8, 10>}]} {
    %c0 = arith.constant 0 : index
    %c0_0 = arith.constant 0 : index
    %0 = vector.load %arg1[%c0, %c0_0] : memref<8x32xf32, #tpu.memory_space<vmem>>, vector<8x32xf32>
    %1 = arith.truncf %0 : vector<8x32xf32> to vector<8x32xbf16>
    %c0_1 = arith.constant 0 : index
    %c0_2 = arith.constant 0 : index
    %2 = vector.load %arg2[%c0_1, %c0_2] : memref<32x64xbf16, #tpu.memory_space<vmem>>, vector<32x64xbf16>
    %cst = arith.constant dense<0.000000e+00> : vector<8x64xf32>
    %3 = tpu.matmul %1, %2, %cst {dimension_numbers = #tpu.dot_dimension_numbers<[1], [0], [0], [1], [0, 0, 1, 1], [], []>} : vector<8x32xbf16>, vector<32x64xbf16>, vector<8x64xf32> -> vector<8x64xf32>
    %c0_3 = arith.constant 0 : index
    %c0_4 = arith.constant 0 : index
    %4 = vector.load %arg3[%c0_3, %c0_4] : memref<1x64xf32, #tpu.memory_space<vmem>>, vector<1x64xf32>
    %5 = vector.broadcast %4 : vector<1x64xf32> to vector<8x64xf32>
    %6 = arith.addf %3, %5 : vector<8x64xf32>
    %cst_5 = arith.constant 0.000000e+00 : f32
    %7 = vector.broadcast %cst_5 : f32 to vector<8x64xf32>
    %8 = arith.maximumf %6, %7 : vector<8x64xf32>
    %9 = arith.truncf %8 : vector<8x64xf32> to vector<8x64xbf16>
    %c0_6 = arith.constant 0 : index
    %c0_7 = arith.constant 0 : index
    %10 = vector.load %arg4[%c0_6, %c0_7] : memref<64x32xbf16, #tpu.memory_space<vmem>>, vector<64x32xbf16>
    %cst_8 = arith.constant dense<0.000000e+00> : vector<8x32xf32>
    %11 = tpu.matmul %9, %10, %cst_8 {dimension_numbers = #tpu.dot_dimension_numbers<[1], [0], [0], [1], [0, 0, 1, 1], [], []>} : vector<8x64xbf16>, vector<64x32xbf16>, vector<8x32xf32> -> vector<8x32xf32>
    %c0_9 = arith.constant 0 : index
    %c0_10 = arith.constant 0 : index
    %12 = vector.load %arg5[%c0_9, %c0_10] : memref<1x32xf32, #tpu.memory_space<vmem>>, vector<1x32xf32>
    %13 = vector.broadcast %12 : vector<1x32xf32> to vector<8x32xf32>
    %14 = arith.addf %11, %13 : vector<8x32xf32>
    %cst_11 = arith.constant 0.000000e+00 : f32
    %15 = vector.broadcast %cst_11 : f32 to vector<8x32xf32>
    %16 = arith.maximumf %14, %15 : vector<8x32xf32>
    %17 = arith.truncf %16 : vector<8x32xf32> to vector<8x32xbf16>
    %c0_12 = arith.constant 0 : index
    %c0_13 = arith.constant 0 : index
    %18 = vector.load %arg6[%c0_12, %c0_13] : memref<32x10xbf16, #tpu.memory_space<vmem>>, vector<32x10xbf16>
    %cst_14 = arith.constant dense<0.000000e+00> : vector<8x10xf32>
    %19 = tpu.matmul %17, %18, %cst_14 {dimension_numbers = #tpu.dot_dimension_numbers<[1], [0], [0], [1], [0, 0, 1, 1], [], []>} : vector<8x32xbf16>, vector<32x10xbf16>, vector<8x10xf32> -> vector<8x10xf32>
    %c0_15 = arith.constant 0 : index
    %c0_16 = arith.constant 0 : index
    %20 = vector.load %arg7[%c0_15, %c0_16] : memref<1x10xf32, #tpu.memory_space<vmem>>, vector<1x10xf32>
    %21 = vector.broadcast %20 : vector<1x10xf32> to vector<8x10xf32>
    %22 = arith.addf %19, %21 : vector<8x10xf32>
    %cst_17 = arith.constant dense<0xFF800000> : vector<8xf32>
    %23 = vector.multi_reduction <maximumf>, %22, %cst_17 [1] : vector<8x10xf32> to vector<8xf32>
    %24 = vector.shape_cast %23 : vector<8xf32> to vector<8x1xf32>
    %25 = vector.broadcast %24 : vector<8x1xf32> to vector<8x10xf32>
    %26 = arith.subf %22, %25 : vector<8x10xf32>
    %27 = math.exp %26 : vector<8x10xf32>
    %cst_18 = arith.constant dense<0.000000e+00> : vector<8xf32>
    %28 = vector.multi_reduction <add>, %27, %cst_18 [1] : vector<8x10xf32> to vector<8xf32>
    %29 = vector.shape_cast %28 : vector<8xf32> to vector<8x1xf32>
    %30 = vector.broadcast %29 : vector<8x1xf32> to vector<8x10xf32>
    %31 = arith.divf %27, %30 : vector<8x10xf32>
    %c0_19 = arith.constant 0 : index
    %c0_20 = arith.constant 0 : index
    %32 = vector.load %arg8[%c0_19, %c0_20] : memref<8x10xf32, #tpu.memory_space<vmem>>, vector<8x10xf32>
    tpu.vector_store %arg8[%c0_19, %c0_20], %31 {strides = array<i32>} : memref<8x10xf32, #tpu.memory_space<vmem>>, vector<8x10xf32>,
    return
  }
  func.func @transform_0(%arg0: i32) -> (i32, i32) {
    %c0_i32 = arith.constant 0 : i32
    %c0_i32_0 = arith.constant 0 : i32
    return %arg0, %c0_i32 : i32, i32
  }
  func.func @transform_1(%arg0: i32) -> (i32, i32) {
    %c0_i32 = arith.constant 0 : i32
    %c0_i32_0 = arith.constant 0 : i32
    %c0_i32_1 = arith.constant 0 : i32
    return %c0_i32, %c0_i32_0 : i32, i32
  }
  func.func @transform_2(%arg0: i32) -> (i32, i32) {
    %c0_i32 = arith.constant 0 : i32
    %c0_i32_0 = arith.constant 0 : i32
    %c0_i32_1 = arith.constant 0 : i32
    return %c0_i32, %c0_i32_0 : i32, i32
  }
  func.func @transform_3(%arg0: i32) -> (i32, i32) {
    %c0_i32 = arith.constant 0 : i32
    %c0_i32_0 = arith.constant 0 : i32
    %c0_i32_1 = arith.constant 0 : i32
    return %c0_i32, %c0_i32_0 : i32, i32
  }
  func.func @transform_4(%arg0: i32) -> (i32, i32) {
    %c0_i32 = arith.constant 0 : i32
    %c0_i32_0 = arith.constant 0 : i32
    %c0_i32_1 = arith.constant 0 : i32
    return %c0_i32, %c0_i32_0 : i32, i32
  }
  func.func @transform_5(%arg0: i32) -> (i32, i32) {
    %c0_i32 = arith.constant 0 : i32
    %c0_i32_0 = arith.constant 0 : i32
    %c0_i32_1 = arith.constant 0 : i32
    return %c0_i32, %c0_i32_0 : i32, i32
  }
  func.func @transform_6(%arg0: i32) -> (i32, i32) {
    %c0_i32 = arith.constant 0 : i32
    %c0_i32_0 = arith.constant 0 : i32
    %c0_i32_1 = arith.constant 0 : i32
    return %c0_i32, %c0_i32_0 : i32, i32
  }
  func.func @transform_7(%arg0: i32) -> (i32, i32) {
    %c0_i32 = arith.constant 0 : i32
    %c0_i32_0 = arith.constant 0 : i32
    return %arg0, %c0_i32 : i32, i32
  }
}

</mosaic_0001>

<llo_original>
// kernel: tpu_custom_call.1
$region0: #{tpu_custom_call.1}
  #allocation0 [shape = 'u32[]', space=smem, size = 0x4, offset = 0x4, fixed_abs, tag = 'smem constant byte address 0x4 - core index']
  #allocation1 [shape = 'u32[144,128]{1,0:T(1,128)}', space=vmem, size = 0x12000, scoped, tag = 'internal scratch']
  %s0 = inlined_call_operand.vmem [shape: f32[20,32], index: 0, kind: input, shape index: {}]
  %s1 = inlined_call_operand.vmem [shape: bf16[32,64], index: 1, kind: input, shape index: {}]
  %s2 = inlined_call_operand.vmem [shape: f32[1,64], index: 2, kind: input, shape index: {}]
  %s3 = inlined_call_operand.vmem [shape: bf16[64,32], index: 3, kind: input, shape index: {}]
  %s4 = inlined_call_operand.vmem [shape: f32[1,32], index: 4, kind: input, shape index: {}]
  %s5 = inlined_call_operand.vmem [shape: bf16[32,10], index: 5, kind: input, shape index: {}]
  %s6 = inlined_call_operand.vmem [shape: f32[1,10], index: 6, kind: input, shape index: {}]
  %s7 = inlined_call_operand.vmem [shape: f32[20,10], index: 7, kind: output, shape index: {}]
  %s8 = sld [smem:[#allocation0]]
  $region61: #{tpu_custom_call.1} parent=0
    _
  %s10 = ssub.s32 1, %s8
  %s11 = scalar_select 0, %s10, %s8
  loop: start=0, step=1, limit=5
  $region2: #{tpu_custom_call.1} parent=0 // loop_pre_header
    _
  $region3: #{tpu_custom_call.1} parent=0 // loop_header
    %s13 = sphi 0, %s17
    %p14 = scmp.ge.s32.totalorder %s13, 5
    %s23 = sphi 0, %s25
    %s26 = sphi 0, %s23
    %s27 = sphi 0, %s26
    %s43 = sphi 0, %s27
    %s47 = sphi 0, %s47
    %s49 = sphi 0, %s47
    %s50 = sphi 0, %s49
    %s64 = sphi 0, %s50
    %s68 = sphi 0, %s68
    %s70 = sphi 0, %s68
    %s71 = sphi 0, %s70
    %s85 = sphi 0, %s71
    %s89 = sphi 0, %s89
    %s91 = sphi 0, %s89
    %s92 = sphi 0, %s91
    %s106 = sphi 0, %s92
    %s110 = sphi 0, %s110
    %s112 = sphi 0, %s110
    %s113 = sphi 0, %s112
    %s127 = sphi 0, %s113
    %s131 = sphi 0, %s131
    %s133 = sphi 0, %s131
    %s134 = sphi 0, %s133
    %s148 = sphi 0, %s134
    %s152 = sphi 0, %s152
    %s154 = sphi 0, %s152
    %s155 = sphi 0, %s154
    %s169 = sphi 0, %s155
    %s175 = sphi 0, %s177
    %s178 = sphi 0, %s175
    %s179 = sphi 0, %s178
    %s195 = sphi 0, %s179
  $region4: #{tpu_custom_call.1} parent=0 // loop_header_branch
    %16 = sbr.rel (%p14) target = $region8
  $region5: #{tpu_custom_call.1} parent=0 // loop_body
    %s18 = ssub.s32 %s13, 1
    %s19 = ssub.s32 %s13, 2
    %s20 = sadd.s32 %s13, 1
    %s21 = ssub.s32 %s13, %s20
    %p22 = scmp.eq.s32.totalorder %s21, 0
    %s24 = sadd.s32 %s23, 1
    %s25 = scalar_select %p22, %s23, %s24
    %p28 = pneg %p22
    %p29 = scmp.eq.s32.totalorder %s13, 2
    %p30 = por %p28, %p29
    %p31 = scmp.ne.s32.totalorder %s23, %s26
    %p32 = scmp.eq.s32.totalorder %s13, 0
    %p33 = por %p31, %p32
    %p34 = scmp.ne.s32.totalorder %s23, %s26
    %p35 = scmp.eq.s32.totalorder %s18, 2
    %p36 = por %p34, %p35
    %p37 = scmp.ne.s32.totalorder %s26, %s27
    %p38 = scmp.eq.s32.totalorder %s18, 0
    %p39 = por %p37, %p38
    %p40 = scmp.ne.s32.totalorder %s26, %s27
    %p41 = scmp.eq.s32.totalorder %s19, 2
    %p42 = por %p40, %p41
    %p44 = scmp.ne.s32.totalorder %s27, %s43
    %p45 = scmp.eq.s32.totalorder %s19, 0
    %p46 = por %p44, %p45
    %s48 = sadd.s32 %s47, 1
    %p51 = scmp.eq.s32.totalorder %s13, 2
    %p52 = scmp.ne.s32.totalorder %s47, %s49
    %p53 = scmp.eq.s32.totalorder %s13, 0
    %p54 = por %p52, %p53
    %p55 = scmp.ne.s32.totalorder %s47, %s49
    %p56 = scmp.eq.s32.totalorder %s18, 2
    %p57 = por %p55, %p56
    %p58 = scmp.ne.s32.totalorder %s49, %s50
    %p59 = scmp.eq.s32.totalorder %s18, 0
    %p60 = por %p58, %p59
    %p61 = scmp.ne.s32.totalorder %s49, %s50
    %p62 = scmp.eq.s32.totalorder %s19, 2
    %p63 = por %p61, %p62
    %p65 = scmp.ne.s32.totalorder %s50, %s64
    %p66 = scmp.eq.s32.totalorder %s19, 0
    %p67 = por %p65, %p66
    %s69 = sadd.s32 %s68, 1
    %p72 = scmp.eq.s32.totalorder %s13, 2
    %p73 = scmp.ne.s32.totalorder %s68, %s70
    %p74 = scmp.eq.s32.totalorder %s13, 0
    %p75 = por %p73, %p74
    %p76 = scmp.ne.s32.totalorder %s68, %s70
    %p77 = scmp.eq.s32.totalorder %s18, 2
    %p78 = por %p76, %p77
    %p79 = scmp.ne.s32.totalorder %s70, %s71
    %p80 = scmp.eq.s32.totalorder %s18, 0
    %p81 = por %p79, %p80
    %p82 = scmp.ne.s32.totalorder %s70, %s71
    %p83 = scmp.eq.s32.totalorder %s19, 2
    %p84 = por %p82, %p83
    %p86 = scmp.ne.s32.totalorder %s71, %s85
    %p87 = scmp.eq.s32.totalorder %s19, 0
    %p88 = por %p86, %p87
    %s90 = sadd.s32 %s89, 1
    %p93 = scmp.eq.s32.totalorder %s13, 2
    %p94 = scmp.ne.s32.totalorder %s89, %s91
    %p95 = scmp.eq.s32.totalorder %s13, 0
    %p96 = por %p94, %p95
    %p97 = scmp.ne.s32.totalorder %s89, %s91
    %p98 = scmp.eq.s32.totalorder %s18, 2
    %p99 = por %p97, %p98
    %p100 = scmp.ne.s32.totalorder %s91, %s92
    %p101 = scmp.eq.s32.totalorder %s18, 0
    %p102 = por %p100, %p101
    %p103 = scmp.ne.s32.totalorder %s91, %s92
    %p104 = scmp.eq.s32.totalorder %s19, 2
    %p105 = por %p103, %p104
    %p107 = scmp.ne.s32.totalorder %s92, %s106
    %p108 = scmp.eq.s32.totalorder %s19, 0
    %p109 = por %p107, %p108
    %s111 = sadd.s32 %s110, 1
    %p114 = scmp.eq.s32.totalorder %s13, 2
    %p115 = scmp.ne.s32.totalorder %s110, %s112
    %p116 = scmp.eq.s32.totalorder %s13, 0
    %p117 = por %p115, %p116
    %p118 = scmp.ne.s32.totalorder %s110, %s112
    %p119 = scmp.eq.s32.totalorder %s18, 2
    %p120 = por %p118, %p119
    %p121 = scmp.ne.s32.totalorder %s112, %s113
    %p122 = scmp.eq.s32.totalorder %s18, 0
    %p123 = por %p121, %p122
    %p124 = scmp.ne.s32.totalorder %s112, %s113
    %p125 = scmp.eq.s32.totalorder %s19, 2
    %p126 = por %p124, %p125
    %p128 = scmp.ne.s32.totalorder %s113, %s127
    %p129 = scmp.eq.s32.totalorder %s19, 0
    %p130 = por %p128, %p129
    %s132 = sadd.s32 %s131, 1
    %p135 = scmp.eq.s32.totalorder %s13, 2
    %p136 = scmp.ne.s32.totalorder %s131, %s133
    %p137 = scmp.eq.s32.totalorder %s13, 0
    %p138 = por %p136, %p137
    %p139 = scmp.ne.s32.totalorder %s131, %s133
    %p140 = scmp.eq.s32.totalorder %s18, 2
    %p141 = por %p139, %p140
    %p142 = scmp.ne.s32.totalorder %s133, %s134
    %p143 = scmp.eq.s32.totalorder %s18, 0
    %p144 = por %p142, %p143
    %p145 = scmp.ne.s32.totalorder %s133, %s134
    %p146 = scmp.eq.s32.totalorder %s19, 2
    %p147 = por %p145, %p146
    %p149 = scmp.ne.s32.totalorder %s134, %s148
    %p150 = scmp.eq.s32.totalorder %s19, 0
    %p151 = por %p149, %p150
    %s153 = sadd.s32 %s152, 1
    %p156 = scmp.eq.s32.totalorder %s13, 2
    %p157 = scmp.ne.s32.totalorder %s152, %s154
    %p158 = scmp.eq.s32.totalorder %s13, 0
    %p159 = por %p157, %p158
    %p160 = scmp.ne.s32.totalorder %s152, %s154
    %p161 = scmp.eq.s32.totalorder %s18, 2
    %p162 = por %p160, %p161
    %p163 = scmp.ne.s32.totalorder %s154, %s155
    %p164 = scmp.eq.s32.totalorder %s18, 0
    %p165 = por %p163, %p164
    %p166 = scmp.ne.s32.totalorder %s154, %s155
    %p167 = scmp.eq.s32.totalorder %s19, 2
    %p168 = por %p166, %p167
    %p170 = scmp.ne.s32.totalorder %s155, %s169
    %p171 = scmp.eq.s32.totalorder %s19, 0
    %p172 = por %p170, %p171
    %s173 = ssub.s32 %s13, %s20
    %p174 = scmp.eq.s32.totalorder %s173, 0
    %s176 = sadd.s32 %s175, 1
    %s177 = scalar_select %p174, %s175, %s176
    %p180 = pneg %p174
    %p181 = scmp.eq.s32.totalorder %s13, 2
    %p182 = por %p180, %p181
    %p183 = scmp.ne.s32.totalorder %s175, %s178
    %p184 = scmp.eq.s32.totalorder %s13, 0
    %p185 = por %p183, %p184
    %p186 = scmp.ne.s32.totalorder %s175, %s178
    %p187 = scmp.eq.s32.totalorder %s18, 2
    %p188 = por %p186, %p187
    %p189 = scmp.ne.s32.totalorder %s178, %s179
    %p190 = scmp.eq.s32.totalorder %s18, 0
    %p191 = por %p189, %p190
    %p192 = scmp.ne.s32.totalorder %s178, %s179
    %p193 = scmp.eq.s32.totalorder %s19, 2
    %p194 = por %p192, %p193
    %p196 = scmp.ne.s32.totalorder %s179, %s195
    %p197 = scmp.eq.s32.totalorder %s19, 0
    %p198 = por %p196, %p197
    %p199 = scmp.le.s32.totalorder 1, %s13
    %p200 = scmp.lt.s32.totalorder %s13, 4
    %p201 = pnand %p199, %p200
    %p202 = pneg %p201
    // Predicated region
    $region9: #{tpu_custom_call.1} parent=5 // pred_check
      _
    $region10: #{tpu_custom_call.1} parent=5 // pred_check_branch
      %204 = sbr.rel (%p201) target = $region12
    $region11: #{tpu_custom_call.1} parent=5 // pred_region
      %s205 = ssub.s32 %s13, 1
      // Predicated region
      $region13: #{tpu_custom_call.1} parent=11 // pred_check
        %p206 = pneg %p60
      $region14: #{tpu_custom_call.1} parent=11 // pred_check_branch
        %208 = sbr.rel (%p206) target = $region16
      $region15: #{tpu_custom_call.1} parent=11 // pred_region
        _
      $region16: #{tpu_custom_call.1} parent=11 // pred_fallthru
        _
      // Predicated region
      $region17: #{tpu_custom_call.1} parent=11 // pred_check
        %p209 = pneg %p81
      $region18: #{tpu_custom_call.1} parent=11 // pred_check_branch
        %211 = sbr.rel (%p209) target = $region20
      $region19: #{tpu_custom_call.1} parent=11 // pred_region
        _
      $region20: #{tpu_custom_call.1} parent=11 // pred_fallthru
        _
      // Predicated region
      $region21: #{tpu_custom_call.1} parent=11 // pred_check
        %p212 = pneg %p102
      $region22: #{tpu_custom_call.1} parent=11 // pred_check_branch
        %214 = sbr.rel (%p212) target = $region24
      $region23: #{tpu_custom_call.1} parent=11 // pred_region
        _
      $region24: #{tpu_custom_call.1} parent=11 // pred_fallthru
        _
      // Predicated region
      $region25: #{tpu_custom_call.1} parent=11 // pred_check
        %p215 = pneg %p123
      $region26: #{tpu_custom_call.1} parent=11 // pred_check_branch
        %217 = sbr.rel (%p215) target = $region28
      $region27: #{tpu_custom_call.1} parent=11 // pred_region
        _
      $region28: #{tpu_custom_call.1} parent=11 // pred_fallthru
        _
      // Predicated region
      $region29: #{tpu_custom_call.1} parent=11 // pred_check
        %p218 = pneg %p144
      $region30: #{tpu_custom_call.1} parent=11 // pred_check_branch
        %220 = sbr.rel (%p218) target = $region32
      $region31: #{tpu_custom_call.1} parent=11 // pred_region
        _
      $region32: #{tpu_custom_call.1} parent=11 // pred_fallthru
        _
      // Predicated region
      $region33: #{tpu_custom_call.1} parent=11 // pred_check
        %p221 = pneg %p165
      $region34: #{tpu_custom_call.1} parent=11 // pred_check_branch
        %223 = sbr.rel (%p221) target = $region36
      $region35: #{tpu_custom_call.1} parent=11 // pred_region
        _
      $region36: #{tpu_custom_call.1} parent=11 // pred_fallthru
        _
    $region12: #{tpu_custom_call.1} parent=5 // pred_fallthru
      _
    %p224 = scmp.lt.s32.totalorder %s13, 3
    // Predicated region
    $region37: #{tpu_custom_call.1} parent=5 // pred_check
      %p225 = pneg %p224
    $region38: #{tpu_custom_call.1} parent=5 // pred_check_branch
      %227 = sbr.rel (%p225) target = $region40
    $region39: #{tpu_custom_call.1} parent=5 // pred_region
      // Predicated region
      $region41: #{tpu_custom_call.1} parent=39 // pred_check
        %p228 = pneg %p33
      $region42: #{tpu_custom_call.1} parent=39 // pred_check_branch
        %230 = sbr.rel (%p228) target = $region44
      $region43: #{tpu_custom_call.1} parent=39 // pred_region
        %p231 = scmp.lt.s32.totalorder %s13, 2
        %s232 = scalar_select %p231, %s13, 2
        %s233 = smul.addr %s232, 8
        %s234 = scalar_lea.vmem %s0, %s233
      $region44: #{tpu_custom_call.1} parent=39 // pred_fallthru
        _
    $region40: #{tpu_custom_call.1} parent=5 // pred_fallthru
      _
    %p235 = scmp.le.s32.totalorder 1, %s13
    %p236 = scmp.lt.s32.totalorder %s13, 4
    %p237 = pnand %p235, %p236
    %p238 = pneg %p237
    // Predicated region
    $region45: #{tpu_custom_call.1} parent=5 // pred_check
      _
    $region46: #{tpu_custom_call.1} parent=5 // pred_check_branch
      %240 = sbr.rel (%p237) target = $region48
    $region47: #{tpu_custom_call.1} parent=5 // pred_region
      %s241 = ssub.s32 %s13, 1
      %p242 = scmp.lt.s32.totalorder %s18, 2
      %s243 = scalar_select %p242, %s18, 2
      %s244 = smul.addr %s243, 8
      %s245 = scalar_lea.vmem %s0, %s244
      %p246 = pneg %p39
      %p247 = pneg %p36
      %p248 = pneg %p60
      %p249 = pneg %p57
      %p250 = pneg %p81
      %p251 = pneg %p78
      %p252 = pneg %p102
      %p253 = pneg %p99
      %p254 = pneg %p123
      %p255 = pneg %p120
      %p256 = pneg %p144
      %p257 = pneg %p141
      %p258 = pneg %p165
      %p259 = pneg %p162
      %p260 = pneg %p191
      %p261 = pneg %p188
      %p262 = scmp.lt.s32.totalorder %s18, 2
      %s263 = scalar_select %p262, %s18, 2
      %s264 = smul.addr %s263, 8
      %s265 = scalar_lea.vmem %s7, %s264
      %p266 = scmp.lt.s32.totalorder %s18, 2
      %s267 = scalar_select %p266, %s18, 2
      %s268 = smul.addr %s267, 8
      %s269 = scalar_lea.vmem %s0, %s268
      %p270 = scmp.lt.s32.totalorder %s18, 2
      %s271 = scalar_select %p270, %s18, 2
      %s272 = smul.addr %s271, 8
      %s273 = scalar_lea.vmem %s7, %s272
      %v275 = vld [vmem:[%s269] sm:$0xff]
      %v276 = vpack.c.bf16 %v275, %v275
      %v277 = vld [vmem:[%s1] sm:$0xf]
      %v278 = vld [vmem:[%s1 + $0x4] sm:$0xf]
      %v279 = vld [vmem:[%s1 + $0x8] sm:$0xf]
      %v280 = vld [vmem:[%s1 + $0xc] sm:$0xf]
      %v281 = vld [vmem:[%s2] sm:$0x1]
      %v283 = vlaneseq
      %v284 = vshrl.u32 %v283, 7
      %v285 = vsub.s32 0, %v284
      %v286 = vrot.slane %v281, %v285
      %v292 = vunpack.c.l.b16 %v277
      %v293 = vunpack.c.l.b16 %v278
      %v294 = vunpack.c.l.b16 %v279
      %v295 = vunpack.c.l.b16 %v280
      %v296 = vpack.c.b16 %v293, %v292
      %v297 = vpack.c.b16 %v295, %v294
      %vm300 = vcmask 261120
      %v302 = vsel %vm300, %v276, 0
      %304 = vmatprep.subr.bf16.mxu0 0
      %305 = vmatpush1.bf16.msra.mxu0 %v296
      %306 = vmatprep.subr.bf16.mxu0 0
      %307 = vmatpush1.bf16.msra.mxu0 %v297
      %308 = vmatprep.subr.bf16.mxu0 0
      %309 = vmatpush1.bf16.msra.mxu0 0
      %310 = vmatprep.subr.bf16.mxu0 0
      %311 = vmatpush1.bf16.msra.mxu0 0
      %312 = vmatprep.subr.bf16.mxu0 0
      %313 = vmatpush1.bf16.msra.mxu0 0
      %314 = vmatprep.subr.bf16.mxu0 0
      %315 = vmatpush1.bf16.msra.mxu0 0
      %316 = vmatprep.subr.bf16.mxu0 0
      %317 = vmatpush1.bf16.msra.mxu0 0
      %318 = vmatprep.subr.bf16.mxu0 0
      %319 = vmatpush1.bf16.msra.mxu0 0
      %320 = vmatprep.subr.bf16.mxu0 0
      %321 = vmatpush1.bf16.msra.mxu0 0
      %322 = vmatprep.subr.bf16.mxu0 0
      %323 = vmatpush1.bf16.msra.mxu0 0
      %324 = vmatprep.subr.bf16.mxu0 0
      %325 = vmatpush1.bf16.msra.mxu0 0
      %326 = vmatprep.subr.bf16.mxu0 0
      %327 = vmatpush1.bf16.msra.mxu0 0
      %328 = vmatprep.subr.bf16.mxu0 0
      %329 = vmatpush1.bf16.msra.mxu0 0
      %330 = vmatprep.subr.bf16.mxu0 0
      %331 = vmatpush1.bf16.msra.mxu0 0
      %332 = vmatprep.subr.bf16.mxu0 0
      %333 = vmatpush1.bf16.msra.mxu0 0
      %334 = vmatprep.subr.bf16.mxu0 0
      %335 = vmatpush1.bf16.msra.mxu0 0
      %336 = vmatprep.mubr.bf16.mxu0 0
      %337 = vmatmul.mubr.bf16.gmra.mrb[0].mxu0 %v302
      %v338 = vpop.f32.mrb[0].mxu0
      %v339 = vadd.f32 %v286, %v338
      %v340 = vpop.f32.mrb[0].mxu0
      %v341 = vpop.f32.mrb[0].mxu0
      %v342 = vpop.f32.mrb[0].mxu0
      %343 = vdwg.mxu0
      %v344 = vmax.f32 %v339, 0.0
      %v345 = vpack.c.bf16 %v344, %v344
      %v346 = vld [vmem:[%s3] sm:$0xf]
      %v347 = vld [vmem:[%s3 + $0x4] sm:$0xf]
      %v348 = vld [vmem:[%s3 + $0x8] sm:$0xf]
      %v349 = vld [vmem:[%s3 + $0xc] sm:$0xf]
      %v350 = vld [vmem:[%s3 + $0x10] sm:$0xf]
      %v351 = vld [vmem:[%s3 + $0x14] sm:$0xf]
      %v352 = vld [vmem:[%s3 + $0x18] sm:$0xf]
      %v353 = vld [vmem:[%s3 + $0x1c] sm:$0xf]
      %v354 = vld [vmem:[%s4] sm:$0x1]
      %v356 = vlaneseq
      %v357 = vshrl.u32 %v356, 7
      %v358 = vsub.s32 0, %v357
      %v359 = vrot.slane %v354, %v358
      %v369 = vunpack.c.l.b16 %v346
      %v370 = vunpack.c.l.b16 %v347
      %v371 = vunpack.c.l.b16 %v348
      %v372 = vunpack.c.l.b16 %v349
      %v373 = vunpack.c.l.b16 %v350
      %v374 = vunpack.c.l.b16 %v351
      %v375 = vunpack.c.l.b16 %v352
      %v376 = vunpack.c.l.b16 %v353
      %v377 = vpack.c.b16 %v370, %v369
      %v378 = vpack.c.b16 %v372, %v371
      %v379 = vpack.c.b16 %v374, %v373
      %v380 = vpack.c.b16 %v376, %v375
      %vm385 = vcmask 523264
      %v387 = vsel %vm385, %v345, 0
      %389 = vmatprep.subr.bf16.mxu0 0
      %390 = vmatpush1.bf16.msra.mxu0 %v377
      %391 = vmatprep.subr.bf16.mxu0 0
      %392 = vmatpush1.bf16.msra.mxu0 %v378
      %393 = vmatprep.subr.bf16.mxu0 0
      %394 = vmatpush1.bf16.msra.mxu0 %v379
      %395 = vmatprep.subr.bf16.mxu0 0
      %396 = vmatpush1.bf16.msra.mxu0 %v380
      %397 = vmatprep.subr.bf16.mxu0 0
      %398 = vmatpush1.bf16.msra.mxu0 0
      %399 = vmatprep.subr.bf16.mxu0 0
      %400 = vmatpush1.bf16.msra.mxu0 0
      %401 = vmatprep.subr.bf16.mxu0 0
      %402 = vmatpush1.bf16.msra.mxu0 0
      %403 = vmatprep.subr.bf16.mxu0 0
      %404 = vmatpush1.bf16.msra.mxu0 0
      %405 = vmatprep.subr.bf16.mxu0 0
      %406 = vmatpush1.bf16.msra.mxu0 0
      %407 = vmatprep.subr.bf16.mxu0 0
      %408 = vmatpush1.bf16.msra.mxu0 0
      %409 = vmatprep.subr.bf16.mxu0 0
      %410 = vmatpush1.bf16.msra.mxu0 0
      %411 = vmatprep.subr.bf16.mxu0 0
      %412 = vmatpush1.bf16.msra.mxu0 0
      %413 = vmatprep.subr.bf16.mxu0 0
      %414 = vmatpush1.bf16.msra.mxu0 0
      %415 = vmatprep.subr.bf16.mxu0 0
      %416 = vmatpush1.bf16.msra.mxu0 0
      %417 = vmatprep.subr.bf16.mxu0 0
      %418 = vmatpush1.bf16.msra.mxu0 0
      %419 = vmatprep.subr.bf16.mxu0 0
      %420 = vmatpush1.bf16.msra.mxu0 0
      %421 = vmatprep.mubr.bf16.mxu0 0
      %422 = vmatmul.mubr.bf16.gmra.mrb[0].mxu0 %v387
      %v423 = vpop.f32.mrb[0].mxu0
      %v424 = vadd.f32 %v359, %v423
      %v425 = vpop.f32.mrb[0].mxu0
      %v426 = vpop.f32.mrb[0].mxu0
      %v427 = vpop.f32.mrb[0].mxu0
      %428 = vdwg.mxu0
      %v429 = vmax.f32 %v424, 0.0
      %v430 = vpack.c.bf16 %v429, %v429
      %v431 = vld [vmem:[%s5] sm:$0xf]
      %v432 = vld [vmem:[%s5 + $0x4] sm:$0xf]
      %v433 = vld [vmem:[%s5 + $0x8] sm:$0xf]
      %v434 = vld [vmem:[%s5 + $0xc] sm:$0xf]
      %v435 = vld [vmem:[%s6] sm:$0x1]
      %v437 = vlaneseq
      %v438 = vshrl.u32 %v437, 7
      %v439 = vsub.s32 0, %v438
      %v440 = vrot.slane %v435, %v439
      %v446 = vunpack.c.l.b16 %v431
      %v447 = vunpack.c.l.b16 %v432
      %v448 = vunpack.c.l.b16 %v433
      %v449 = vunpack.c.l.b16 %v434
      %v450 = vpack.c.b16 %v447, %v446
      %v451 = vpack.c.b16 %v449, %v448
      %v455 = vsel %vm300, %v430, 0
      %457 = vmatprep.subr.bf16.mxu0 0
      %458 = vmatpush1.bf16.msra.mxu0 %v450
      %459 = vmatprep.subr.bf16.mxu0 0
      %460 = vmatpush1.bf16.msra.mxu0 %v451
      %461 = vmatprep.subr.bf16.mxu0 0
      %462 = vmatpush1.bf16.msra.mxu0 0
      %463 = vmatprep.subr.bf16.mxu0 0
      %464 = vmatpush1.bf16.msra.mxu0 0
      %465 = vmatprep.subr.bf16.mxu0 0
      %466 = vmatpush1.bf16.msra.mxu0 0
      %467 = vmatprep.subr.bf16.mxu0 0
      %468 = vmatpush1.bf16.msra.mxu0 0
      %469 = vmatprep.subr.bf16.mxu0 0
      %470 = vmatpush1.bf16.msra.mxu0 0
      %471 = vmatprep.subr.bf16.mxu0 0
      %472 = vmatpush1.bf16.msra.mxu0 0
      %473 = vmatprep.subr.bf16.mxu0 0
      %474 = vmatpush1.bf16.msra.mxu0 0
      %475 = vmatprep.subr.bf16.mxu0 0
      %476 = vmatpush1.bf16.msra.mxu0 0
      %477 = vmatprep.subr.bf16.mxu0 0
      %478 = vmatpush1.bf16.msra.mxu0 0
      %479 = vmatprep.subr.bf16.mxu0 0
      %480 = vmatpush1.bf16.msra.mxu0 0
      %481 = vmatprep.subr.bf16.mxu0 0
      %482 = vmatpush1.bf16.msra.mxu0 0
      %483 = vmatprep.subr.bf16.mxu0 0
      %484 = vmatpush1.bf16.msra.mxu0 0
      %485 = vmatprep.subr.bf16.mxu0 0
      %486 = vmatpush1.bf16.msra.mxu0 0
      %487 = vmatprep.subr.bf16.mxu0 0
      %488 = vmatpush1.bf16.msra.mxu0 0
      %489 = vmatprep.mubr.bf16.mxu0 0
      %490 = vmatmul.mubr.bf16.gmra.mrb[0].mxu0 %v455
      %v491 = vpop.f32.mrb[0].mxu0
      %v492 = vadd.f32 %v440, %v491
      %v493 = vpop.f32.mrb[0].mxu0
      %v494 = vpop.f32.mrb[0].mxu0
      %v495 = vpop.f32.mrb[0].mxu0
      %496 = vdwg.mxu0
      %vm497 = vcmask 80896
      %v498 = vsel %vm497, %v492, -inf
      %499 = vmax.xlane.f32.xlu0 %v498
      %v500 = vpop.xlane.xlu0 %499
      %v501 = vsub.f32 %v492, %v500
      %v502 = vmul.f32 %v501, 1.442695
      %v503 = vpow.pop %v502
      %v504 = vsel %vm497, %v503, 0.0
      %505 = vadd.xlane.f32.xlu0 %v504
      %v506 = vpop.xlane.xlu0 %505
      %v507 = vrcp.pop %v506
      %v508 = vmul.f32 %v503, %v507
      %509 = vst.msk [vmem:[%s273] sm:$0xff] %vm497, %v508
      %p510 = scmp.lt.s32.totalorder %s18, 2
      %s511 = scalar_select %p510, %s18, 2
      %s512 = smul.addr %s511, 8
      %s513 = scalar_lea.vmem %s7, %s512
      // Predicated region
      $region49: #{tpu_custom_call.1} parent=47 // pred_check
        %p514 = pneg %p188
      $region50: #{tpu_custom_call.1} parent=47 // pred_check_branch
        %516 = sbr.rel (%p514) target = $region52
      $region51: #{tpu_custom_call.1} parent=47 // pred_region
        _
      $region52: #{tpu_custom_call.1} parent=47 // pred_fallthru
        _
    $region48: #{tpu_custom_call.1} parent=5 // pred_fallthru
      _
    %p517 = scmp.le.s32.totalorder 2, %s13
    // Predicated region
    $region53: #{tpu_custom_call.1} parent=5 // pred_check
      %p518 = pneg %p517
    $region54: #{tpu_custom_call.1} parent=5 // pred_check_branch
      %520 = sbr.rel (%p518) target = $region56
    $region55: #{tpu_custom_call.1} parent=5 // pred_region
      %s521 = ssub.s32 %s13, 2
      // Predicated region
      $region57: #{tpu_custom_call.1} parent=55 // pred_check
        %p522 = pneg %p194
      $region58: #{tpu_custom_call.1} parent=55 // pred_check_branch
        %524 = sbr.rel (%p522) target = $region60
      $region59: #{tpu_custom_call.1} parent=55 // pred_region
        %p525 = scmp.lt.s32.totalorder %s19, 2
        %s526 = scalar_select %p525, %s19, 2
        %s527 = smul.addr %s526, 8
        %s528 = scalar_lea.vmem %s7, %s527
      $region60: #{tpu_custom_call.1} parent=55 // pred_fallthru
        _
    $region56: #{tpu_custom_call.1} parent=5 // pred_fallthru
      _
  $region6: #{tpu_custom_call.1} parent=0 // loop_footer
    %s17 = sadd.s32 1, %s13
  $region7: #{tpu_custom_call.1} parent=0 // loop_footer_branch
    %12 = sbr.rel target = $region3
  $region8: #{tpu_custom_call.1} parent=0 // loop_exit
    _

</llo_original>
